<compile_context>
chip_gen: v7x
topology: tpu7x:2x2x1
jax: 0.10.0
libtpu: 0.0.40
codegen_flags: <defaults>
</compile_context>

<pallas_src>
import functools

import jax
import jax.numpy as jnp
from jax.experimental import pallas as pl
from jax.experimental.pallas import tpu as pltpu

LN_EPS = 1e-5  # nn.LayerNorm default


def _make_addnorm_kernel(nk: int):
    """Kernel factory; nk (number of K steps) is baked in statically."""

    def kernel(xk_ref, w_ref, b_ref, gamma_ref, beta_ref, o_ref, acc_ref):
        # xk_ref:    (TM, TK)  K-slab of the input rows (native dtype); it doubles
        #                      as the residual for output cols [k*TK, (k+1)*TK).
        # w_ref:     (TK, D)   weight slab, pre-transposed to [in, out].
        # b_ref:     (1, D)    linear bias
        # gamma_ref: (1, D)    LayerNorm weight
        # beta_ref:  (1, D)    LayerNorm bias
        # o_ref:     (TM, D)   output rows
        # acc_ref:   (TM, D)   f32 accumulator scratch (matmul + bias + residual)
        k = pl.program_id(1)
        tk = xk_ref.shape[1]

        @pl.when(k == 0)
        def _():
            # Fold the linear bias into the accumulator init (saves an epilogue add).
            acc_ref[...] = jnp.broadcast_to(
                b_ref[...].astype(jnp.float32), acc_ref.shape)

        # Partial matmul on the MXU: operands stay in their native (bf16-friendly)
        # dtype, accumulation is f32.
        acc_ref[...] += jnp.dot(xk_ref[...], w_ref[...],
                                preferred_element_type=jnp.float32)

        # Residual add: layer is square, so the residual for output columns
        # [k*tk, (k+1)*tk) is exactly the current x K-slab.
        x_res = xk_ref[...].astype(jnp.float32)
        if nk == 1:
            acc_ref[...] += x_res
        else:
            col = pl.multiple_of(k * tk, tk)  # tk is a multiple of 128 when nk > 1
            acc_ref[:, pl.ds(col, tk)] += x_res

        @pl.when(k == nk - 1)
        def _():
            # TODO(synk): Dropout is identity here (eval mode). Training-mode dropout
            # would mask the matmul result via pltpu.prng_seed + pltpu.stateful_bernoulli.
            inv_d = jnp.float32(1.0 / acc_ref.shape[-1])
            mean = jnp.sum(acc_ref[...], axis=-1, keepdims=True) * inv_d
            acc_ref[...] -= mean  # center in place (no extra (TM, D) temporary)
            var = jnp.sum(acc_ref[...] * acc_ref[...], axis=-1,
                          keepdims=True) * inv_d
            scale = jax.lax.rsqrt(var + jnp.float32(LN_EPS))  # (TM, 1), EUP slot
            o_ref[...] = (acc_ref[...] * scale
                          * gamma_ref[...].astype(jnp.float32)
                          + beta_ref[...].astype(jnp.float32)).astype(o_ref.dtype)

    return kernel


def _choose_config(m, dim, x_itemsize, w_itemsize, o_itemsize):
    """Pick (tm, tk, vmem_limit_bytes) from the problem shape and TPU generation."""
    kind = ""
    try:
        kind = jax.devices()[0].device_kind.lower()
    except Exception:
        pass
    # v5e/v5p/v6e have 128 MiB VMEM per core; v7x has 64 MiB per TensorCore.
    big_vmem = ("v5" in kind) or ("v6" in kind)
    budget = (80 << 20) if big_vmem else (40 << 20)      # working-set target
    vmem_cap = (100 << 20) if big_vmem else (50 << 20)   # never ask for all of VMEM

    m_pad = ((m + 7) // 8) * 8

    # --- K (contraction) tile: keep the whole weight resident when it fits,
    # otherwise the largest MXU-aligned divisor of dim within budget.
    def w_bytes(t):  # (t, dim) weight slab, double-buffered by the pipeline
        return 2 * t * dim * w_itemsize

    if w_bytes(dim) <= budget // 2:
        tk = dim  # resident weight -> nk == 1, no per-row-tile W re-stream
    else:
        tk = None
        for cand in (2048, 1024, 512, 256, 128):
            if dim % cand == 0 and w_bytes(cand) <= budget // 2:
                tk = cand
                break
        if tk is None:
            # TODO(synk): pad dim up to a multiple of 128 for huge unaligned dims.
            tk = dim

    # --- Row tile: biggest tile whose x/out/acc buffers fit the remaining budget
    # (fewer W re-stream passes, fewer full-accumulator RMW epilogues).
    rem = budget - w_bytes(tk)
    per_row = 2 * tk * x_itemsize + 2 * dim * o_itemsize + 4 * dim
    tm = 8
    for cand in (1024, 512, 256, 128, 64, 32, 16, 8):
        if cand * per_row <= rem:
            tm = cand
            break
    tm = min(tm, m_pad)  # m_pad is a multiple of 8, so tm stays (8,·)-aligned

    needed = (2 * tm * tk * x_itemsize + w_bytes(tk)
              + 2 * tm * dim * o_itemsize + 4 * tm * dim + 24 * dim)
    vmem_limit = int(min(vmem_cap, max(32 << 20, needed + (16 << 20))))
    return tm, tk, vmem_limit


@functools.partial(jax.jit, static_argnames=("tm", "tk", "vmem_limit"))
def _addnorm_impl(x, w, b, gamma, beta, *, tm, tk, vmem_limit):
    batch, seq, dim = x.shape
    m = batch * seq
    x2 = x.reshape(m, dim)

    # Pad the row count to a multiple of 8 (sublane tile); padded rows are
    # computed independently and sliced away afterwards.
    m_pad = ((m + 7) // 8) * 8
    if m_pad != m:
        x2 = jnp.pad(x2, ((0, m_pad - m), (0, 0)))

    # One-time transpose to [in, out]: contraction dim lands on the RHS sublane
    # axis -> clean MXU lowering, no per-tile transpose in the kernel.
    wt = w.T
    b2 = b.reshape(1, dim)
    g2 = gamma.reshape(1, dim)
    be2 = beta.reshape(1, dim)

    nk = dim // tk
    grid = (pl.cdiv(m_pad, tm), nk)

    out2 = pl.pallas_call(
        _make_addnorm_kernel(nk),
        out_shape=jax.ShapeDtypeStruct((m_pad, dim), x.dtype),
        grid_spec=pltpu.PrefetchScalarGridSpec(
            num_scalar_prefetch=0,
            grid=grid,
            in_specs=[
                pl.BlockSpec((tm, tk), lambda i, k: (i, k)),    # x K-slab / residual
                pl.BlockSpec((tk, dim), lambda i, k: (k, 0)),   # W^T slab [in, out]
                pl.BlockSpec((1, dim), lambda i, k: (0, 0)),    # bias
                pl.BlockSpec((1, dim), lambda i, k: (0, 0)),    # LN gamma
                pl.BlockSpec((1, dim), lambda i, k: (0, 0)),    # LN beta
            ],
            out_specs=pl.BlockSpec((tm, dim), lambda i, k: (i, 0)),
            scratch_shapes=[pltpu.VMEM((tm, dim), jnp.float32)],
        ),
        compiler_params=pltpu.CompilerParams(
            dimension_semantics=("parallel", "arbitrary"),
            vmem_limit_bytes=vmem_limit),
    )(x2, wt, b2, g2, be2)

    return out2[:m].reshape(batch, seq, dim)


def add_norm_wrapper(x, w, b, gamma, beta):
    """x: [batch, seq, dim]; w: [dim, dim] (PyTorch Linear weight, [out, in]);
    b / gamma / beta: [dim]."""
    batch, seq, dim = x.shape
    tm, tk, vmem_limit = _choose_config(batch * seq, dim,
                                        x.dtype.itemsize, w.dtype.itemsize,
                                        x.dtype.itemsize)
    return _addnorm_impl(x, w, b, gamma, beta, tm=tm, tk=tk,
                         vmem_limit=vmem_limit)


def reference(x, w, b, gamma, beta):
    """Pure-JAX reference matching the PyTorch module in eval mode."""
    y = jnp.einsum("bsd,ed->bse", x, w) + b
    z = x + y
    mean = jnp.mean(z, axis=-1, keepdims=True)
    var = jnp.mean((z - mean) ** 2, axis=-1, keepdims=True)
    return (z - mean) * jax.lax.rsqrt(var + LN_EPS) * gamma + beta


if __name__ == "__main__":
    batch, seq, dim = 2, 8, 32

    key = jax.random.PRNGKey(0)
    kx, kw, kb, kg, kbe = jax.random.split(key, 5)

    x = jax.random.normal(kx, (batch, seq, dim), dtype=jnp.float32)
    # nn.Linear(dim, dim) params (deterministic synthetic init)
    w = jax.random.normal(kw, (dim, dim), dtype=jnp.float32) * (1.0 / dim ** 0.5)
    b = jax.random.normal(kb, (dim,), dtype=jnp.float32) * 0.01
    # nn.LayerNorm(dim) params (perturbed from default so they matter)
    gamma = 1.0 + 0.1 * jax.random.normal(kg, (dim,), dtype=jnp.float32)
    beta = 0.1 * jax.random.normal(kbe, (dim,), dtype=jnp.float32)

    out = add_norm_wrapper(x, w, b, gamma, beta)
    out = jax.block_until_ready(out)

    ref = reference(x, w, b, gamma, beta)
    assert out.shape == (batch, seq, dim)
    assert jnp.allclose(out, ref, atol=1e-4, rtol=1e-4), "mismatch vs reference"

    print("KERNEL_OK")
</pallas_src>

<mosaic_0001>
module attributes {stable_mosaic.version = 11 : i64} {
  func.func @kernel(%arg0: i32, %arg1: i32, %arg2: memref<16x32xf32, #tpu.memory_space<vmem>>, %arg3: memref<32x32xf32, #tpu.memory_space<vmem>>, %arg4: memref<1x32xf32, #tpu.memory_space<vmem>>, %arg5: memref<1x32xf32, #tpu.memory_space<vmem>>, %arg6: memref<1x32xf32, #tpu.memory_space<vmem>>, %arg7: memref<16x32xf32, #tpu.memory_space<vmem>>, %arg8: memref<16x32xf32, #tpu.memory_space<vmem>>) attributes {dimension_semantics = [#tpu.dimension_semantics<parallel>, #tpu.dimension_semantics<arbitrary>], iteration_bounds = array<i64: 1, 1>, scalar_prefetch = 0 : i64, scratch_operands = 1 : i64, tpu.core_type = #tpu.core_type<tc>, window_params = [{transform_indices = @transform_0, window_bounds = array<i64: 16, 32>}, {transform_indices = @transform_1, window_bounds = array<i64: 32, 32>}, {pipeline_mode = #tpu.pipeline_mode<synchronous>, transform_indices = @transform_2, window_bounds = array<i64: 1, 32>}, {pipeline_mode = #tpu.pipeline_mode<synchronous>, transform_indices = @transform_3, window_bounds = array<i64: 1, 32>}, {pipeline_mode = #tpu.pipeline_mode<synchronous>, transform_indices = @transform_4, window_bounds = array<i64: 1, 32>}, {transform_indices = @transform_5, window_bounds = array<i64: 16, 32>}]} {
    %c0_i32 = arith.constant 0 : i32
    %0 = arith.cmpi eq, %arg1, %c0_i32 : i32
    %1 = arith.extui %0 : i1 to i32
    %c0_i32_0 = arith.constant 0 : i32
    %2 = arith.cmpi ne, %1, %c0_i32_0 : i32
    scf.if %2 {
      %c0_16 = arith.constant 0 : index
      %c0_17 = arith.constant 0 : index
      %16 = vector.load %arg4[%c0_16, %c0_17] : memref<1x32xf32, #tpu.memory_space<vmem>>, vector<1x32xf32>
      %17 = vector.shape_cast %16 : vector<1x32xf32> to vector<1x32xf32>
      %18 = vector.broadcast %17 : vector<1x32xf32> to vector<16x32xf32>
      %c0_18 = arith.constant 0 : index
      %c0_19 = arith.constant 0 : index
      %19 = vector.load %arg8[%c0_18, %c0_19] : memref<16x32xf32, #tpu.memory_space<vmem>>, vector<16x32xf32>
      tpu.vector_store %arg8[%c0_18, %c0_19], %18 {strides = array<i32>} : memref<16x32xf32, #tpu.memory_space<vmem>>, vector<16x32xf32>,
    } else {
    }
    %c0 = arith.constant 0 : index
    %c0_1 = arith.constant 0 : index
    %3 = vector.load %arg8[%c0, %c0_1] : memref<16x32xf32, #tpu.memory_space<vmem>>, vector<16x32xf32>
    %c0_2 = arith.constant 0 : index
    %c0_3 = arith.constant 0 : index
    %4 = vector.load %arg2[%c0_2, %c0_3] : memref<16x32xf32, #tpu.memory_space<vmem>>, vector<16x32xf32>
    %c0_4 = arith.constant 0 : index
    %c0_5 = arith.constant 0 : index
    %5 = vector.load %arg3[%c0_4, %c0_5] : memref<32x32xf32, #tpu.memory_space<vmem>>, vector<32x32xf32>
    %cst = arith.constant dense<0.000000e+00> : vector<16x32xf32>
    %6 = tpu.matmul %4, %5, %cst {dimension_numbers = #tpu.dot_dimension_numbers<[1], [0], [0], [1], [0, 0, 1, 1], [], []>} : vector<16x32xf32>, vector<32x32xf32>, vector<16x32xf32> -> vector<16x32xf32>
    %7 = arith.addf %3, %6 : vector<16x32xf32>
    %c0_6 = arith.constant 0 : index
    %c0_7 = arith.constant 0 : index
    %8 = vector.load %arg8[%c0_6, %c0_7] : memref<16x32xf32, #tpu.memory_space<vmem>>, vector<16x32xf32>
    tpu.vector_store %arg8[%c0_6, %c0_7], %7 {strides = array<i32>} : memref<16x32xf32, #tpu.memory_space<vmem>>, vector<16x32xf32>,
    %c0_8 = arith.constant 0 : index
    %c0_9 = arith.constant 0 : index
    %9 = vector.load %arg2[%c0_8, %c0_9] : memref<16x32xf32, #tpu.memory_space<vmem>>, vector<16x32xf32>
    %c0_10 = arith.constant 0 : index
    %c0_11 = arith.constant 0 : index
    %10 = vector.load %arg8[%c0_10, %c0_11] : memref<16x32xf32, #tpu.memory_space<vmem>>, vector<16x32xf32>
    %11 = arith.addf %10, %9 : vector<16x32xf32>
    %c0_12 = arith.constant 0 : index
    %c0_13 = arith.constant 0 : index
    %12 = vector.load %arg8[%c0_12, %c0_13] : memref<16x32xf32, #tpu.memory_space<vmem>>, vector<16x32xf32>
    tpu.vector_store %arg8[%c0_12, %c0_13], %11 {strides = array<i32>} : memref<16x32xf32, #tpu.memory_space<vmem>>, vector<16x32xf32>,
    %c0_i32_14 = arith.constant 0 : i32
    %13 = arith.cmpi eq, %arg1, %c0_i32_14 : i32
    %14 = arith.extui %13 : i1 to i32
    %c0_i32_15 = arith.constant 0 : i32
    %15 = arith.cmpi ne, %14, %c0_i32_15 : i32
    scf.if %15 {
      %c0_16 = arith.constant 0 : index
      %c0_17 = arith.constant 0 : index
      %16 = vector.load %arg8[%c0_16, %c0_17] : memref<16x32xf32, #tpu.memory_space<vmem>>, vector<16x32xf32>
      %cst_18 = arith.constant dense<0.000000e+00> : vector<16xf32>
      %17 = vector.multi_reduction <add>, %16, %cst_18 [1] : vector<16x32xf32> to vector<16xf32>
      %18 = vector.shape_cast %17 : vector<16xf32> to vector<16x1xf32>
      %cst_19 = arith.constant 3.125000e-02 : f32
      %19 = vector.broadcast %cst_19 : f32 to vector<16x1xf32>
      %20 = arith.mulf %18, %19 : vector<16x1xf32>
      %c0_20 = arith.constant 0 : index
      %c0_21 = arith.constant 0 : index
      %21 = vector.load %arg8[%c0_20, %c0_21] : memref<16x32xf32, #tpu.memory_space<vmem>>, vector<16x32xf32>
      %22 = vector.broadcast %20 : vector<16x1xf32> to vector<16x32xf32>
      %23 = arith.subf %21, %22 : vector<16x32xf32>
      %c0_22 = arith.constant 0 : index
      %c0_23 = arith.constant 0 : index
      %24 = vector.load %arg8[%c0_22, %c0_23] : memref<16x32xf32, #tpu.memory_space<vmem>>, vector<16x32xf32>
      tpu.vector_store %arg8[%c0_22, %c0_23], %23 {strides = array<i32>} : memref<16x32xf32, #tpu.memory_space<vmem>>, vector<16x32xf32>,
      %c0_24 = arith.constant 0 : index
      %c0_25 = arith.constant 0 : index
      %25 = vector.load %arg8[%c0_24, %c0_25] : memref<16x32xf32, #tpu.memory_space<vmem>>, vector<16x32xf32>
      %c0_26 = arith.constant 0 : index
      %c0_27 = arith.constant 0 : index
      %26 = vector.load %arg8[%c0_26, %c0_27] : memref<16x32xf32, #tpu.memory_space<vmem>>, vector<16x32xf32>
      %27 = arith.mulf %25, %26 : vector<16x32xf32>
      %cst_28 = arith.constant dense<0.000000e+00> : vector<16xf32>
      %28 = vector.multi_reduction <add>, %27, %cst_28 [1] : vector<16x32xf32> to vector<16xf32>
      %29 = vector.shape_cast %28 : vector<16xf32> to vector<16x1xf32>
      %cst_29 = arith.constant 3.125000e-02 : f32
      %30 = vector.broadcast %cst_29 : f32 to vector<16x1xf32>
      %31 = arith.mulf %29, %30 : vector<16x1xf32>
      %cst_30 = arith.constant 9.99999974E-6 : f32
      %32 = vector.broadcast %cst_30 : f32 to vector<16x1xf32>
      %33 = arith.addf %31, %32 : vector<16x1xf32>
      %34 = math.rsqrt %33 : vector<16x1xf32>
      %c0_31 = arith.constant 0 : index
      %c0_32 = arith.constant 0 : index
      %35 = vector.load %arg8[%c0_31, %c0_32] : memref<16x32xf32, #tpu.memory_space<vmem>>, vector<16x32xf32>
      %36 = vector.broadcast %34 : vector<16x1xf32> to vector<16x32xf32>
      %37 = arith.mulf %35, %36 : vector<16x32xf32>
      %c0_33 = arith.constant 0 : index
      %c0_34 = arith.constant 0 : index
      %38 = vector.load %arg5[%c0_33, %c0_34] : memref<1x32xf32, #tpu.memory_space<vmem>>, vector<1x32xf32>
      %39 = vector.broadcast %38 : vector<1x32xf32> to vector<16x32xf32>
      %40 = arith.mulf %37, %39 : vector<16x32xf32>
      %c0_35 = arith.constant 0 : index
      %c0_36 = arith.constant 0 : index
      %41 = vector.load %arg6[%c0_35, %c0_36] : memref<1x32xf32, #tpu.memory_space<vmem>>, vector<1x32xf32>
      %42 = vector.broadcast %41 : vector<1x32xf32> to vector<16x32xf32>
      %43 = arith.addf %40, %42 : vector<16x32xf32>
      %c0_37 = arith.constant 0 : index
      %c0_38 = arith.constant 0 : index
      %44 = vector.load %arg7[%c0_37, %c0_38] : memref<16x32xf32, #tpu.memory_space<vmem>>, vector<16x32xf32>
      tpu.vector_store %arg7[%c0_37, %c0_38], %43 {strides = array<i32>} : memref<16x32xf32, #tpu.memory_space<vmem>>, vector<16x32xf32>,
    } else {
    }
    return
  }
  func.func @transform_0(%arg0: i32, %arg1: i32) -> (i32, i32) {
    %c0_i32 = arith.constant 0 : i32
    return %arg0, %arg1 : i32, i32
  }
  func.func @transform_1(%arg0: i32, %arg1: i32) -> (i32, i32) {
    %c0_i32 = arith.constant 0 : i32
    %c0_i32_0 = arith.constant 0 : i32
    return %arg1, %c0_i32 : i32, i32
  }
  func.func @transform_2(%arg0: i32, %arg1: i32) -> (i32, i32) {
    %c0_i32 = arith.constant 0 : i32
    %c0_i32_0 = arith.constant 0 : i32
    %c0_i32_1 = arith.constant 0 : i32
    return %c0_i32, %c0_i32_0 : i32, i32
  }
  func.func @transform_3(%arg0: i32, %arg1: i32) -> (i32, i32) {
    %c0_i32 = arith.constant 0 : i32
    %c0_i32_0 = arith.constant 0 : i32
    %c0_i32_1 = arith.constant 0 : i32
    return %c0_i32, %c0_i32_0 : i32, i32
  }
  func.func @transform_4(%arg0: i32, %arg1: i32) -> (i32, i32) {
    %c0_i32 = arith.constant 0 : i32
    %c0_i32_0 = arith.constant 0 : i32
    %c0_i32_1 = arith.constant 0 : i32
    return %c0_i32, %c0_i32_0 : i32, i32
  }
  func.func @transform_5(%arg0: i32, %arg1: i32) -> (i32, i32) {
    %c0_i32 = arith.constant 0 : i32
    %c0_i32_0 = arith.constant 0 : i32
    return %arg0, %c0_i32 : i32, i32
  }
}

</mosaic_0001>

<llo_original>
// kernel: _addnorm_impl.1
$region0: #{_addnorm_impl.1}
  #allocation0 [shape = 'u32[]', space=smem, size = 0x4, offset = 0x4, fixed_abs, tag = 'smem constant byte address 0x4 - core index']
  #allocation1 [shape = 'u32[144,128]{1,0:T(1,128)}', space=vmem, size = 0x12000, scoped, tag = 'internal scratch']
  #allocation2 [shape = 'f32[16,32]{1,0:T(8,128)}', space=vmem, size = 0x2000, scoped, tag = 'scratch operand']
  %s0 = inlined_call_operand.vmem [shape: f32[16,32], index: 0, kind: input, shape index: {}]
  %s1 = inlined_call_operand.vmem [shape: f32[32,32], index: 1, kind: input, shape index: {}]
  %s2 = inlined_call_operand.vmem [shape: f32[1,32], index: 2, kind: input, shape index: {}]
  %s3 = inlined_call_operand.vmem [shape: f32[1,32], index: 3, kind: input, shape index: {}]
  %s4 = inlined_call_operand.vmem [shape: f32[1,32], index: 4, kind: input, shape index: {}]
  %s5 = inlined_call_operand.hbm [shape: f32[16,32], index: 5, kind: output, shape index: {}]
  %s6 = sld [smem:[#allocation0]]
  $region38: #{_addnorm_impl.1} parent=0
    _
  %s8 = ssub.s32 1, %s6
  %s9 = scalar_select 0, %s8, %s6
  $region1: #{_addnorm_impl.1} parent=0
    #allocation3 [shape = 'u8[8192]{0}', space=vmem, size = 0x2000, scoped, tag = 'output window, operand 0, single buffered']
    #allocation4 [shape = 's32[1]{0}', space=sflag, size = 0x4, scoped, tag = 'scoped memory for _addnorm_impl.1']
    %10 = vsyncpa [#allocation4], 0
    // Predicated region
    $region2: #{_addnorm_impl.1} parent=1 // pred_check
      _
    $region3: #{_addnorm_impl.1} parent=1 // pred_check_branch
      %12 = sbr.rel (0) target = $region5
    $region4: #{_addnorm_impl.1} parent=1 // pred_region
      _
    $region5: #{_addnorm_impl.1} parent=1 // pred_fallthru
      _
    // Predicated region
    $region6: #{_addnorm_impl.1} parent=1 // pred_check
      _
    $region7: #{_addnorm_impl.1} parent=1 // pred_check_branch
      %14 = sbr.rel (0) target = $region9
    $region8: #{_addnorm_impl.1} parent=1 // pred_region
      _
    $region9: #{_addnorm_impl.1} parent=1 // pred_fallthru
      _
    // Predicated region
    $region10: #{_addnorm_impl.1} parent=1 // pred_check
      _
    $region11: #{_addnorm_impl.1} parent=1 // pred_check_branch
      %16 = sbr.rel (0) target = $region13
    $region12: #{_addnorm_impl.1} parent=1 // pred_region
      _
    $region13: #{_addnorm_impl.1} parent=1 // pred_fallthru
      _
    // Predicated region
    $region14: #{_addnorm_impl.1} parent=1 // pred_check
      _
    $region15: #{_addnorm_impl.1} parent=1 // pred_check_branch
      %18 = sbr.rel (0) target = $region17
    $region16: #{_addnorm_impl.1} parent=1 // pred_region
      _
    $region17: #{_addnorm_impl.1} parent=1 // pred_fallthru
      _
    // Predicated region
    $region18: #{_addnorm_impl.1} parent=1 // pred_check
      _
    $region19: #{_addnorm_impl.1} parent=1 // pred_check_branch
      %20 = sbr.rel (0) target = $region21
    $region20: #{_addnorm_impl.1} parent=1 // pred_region
      _
    $region21: #{_addnorm_impl.1} parent=1 // pred_fallthru
      _
    %p21 = scmp.eq.s32.totalorder 0, 0
    // Predicated region
    $region22: #{_addnorm_impl.1} parent=1 // pred_check
      %p22 = pneg %p21
    $region23: #{_addnorm_impl.1} parent=1 // pred_check_branch
      %24 = sbr.rel (%p22) target = $region25
    $region24: #{_addnorm_impl.1} parent=1 // pred_region
      %v25 = vld [vmem:[%s2] sm:$0x1]
      %v27 = vlaneseq
      %v28 = vshrl.u32 %v27, 7
      %v29 = vsub.s32 0, %v28
      %v30 = vrot.slane %v25, %v29
      %vm32 = vcmask 261120
      %33 = vst.msk [vmem:[#allocation2] sm:$0xff] %vm32, %v30
      %34 = vst.msk [vmem:[#allocation2 + $0x8] sm:$0xff] %vm32, %v30
    $region25: #{_addnorm_impl.1} parent=1 // pred_fallthru
      _
    %v35 = vld [vmem:[#allocation2] sm:$0xff]
    %v36 = vld [vmem:[#allocation2 + $0x8] sm:$0xff]
    %v37 = vld [vmem:[%s0] sm:$0xff]
    %v38 = vld [vmem:[%s0 + $0x8] sm:$0xff]
    %v39 = vld [vmem:[%s1] sm:$0xff]
    %v40 = vld [vmem:[%s1 + $0x8] sm:$0xff]
    %v41 = vld [vmem:[%s1 + $0x10] sm:$0xff]
    %v42 = vld [vmem:[%s1 + $0x18] sm:$0xff]
    %vm43 = vcmask 261120
    %v45 = vsel %vm43, %v37, 0
    %v48 = vsel %vm43, %v38, 0
    %50 = vmatprep.subr.mxu0 0.0
    %51 = vmatpush1.msra.mxu0 %v39
    %52 = vmatprep.subr.mxu0 0.0
    %53 = vmatpush1.msra.mxu0 %v40
    %54 = vmatprep.subr.mxu0 0.0
    %55 = vmatpush1.msra.mxu0 %v41
    %56 = vmatprep.subr.mxu0 0.0
    %57 = vmatpush1.msra.mxu0 %v42
    %58 = vmatprep.subr.mxu0 0.0
    %59 = vmatpush1.msra.mxu0 0.0
    %60 = vmatprep.subr.mxu0 0.0
    %61 = vmatpush1.msra.mxu0 0.0
    %62 = vmatprep.subr.mxu0 0.0
    %63 = vmatpush1.msra.mxu0 0.0
    %64 = vmatprep.subr.mxu0 0.0
    %65 = vmatpush1.msra.mxu0 0.0
    %66 = vmatprep.subr.mxu0 0.0
    %67 = vmatpush1.msra.mxu0 0.0
    %68 = vmatprep.subr.mxu0 0.0
    %69 = vmatpush1.msra.mxu0 0.0
    %70 = vmatprep.subr.mxu0 0.0
    %71 = vmatpush1.msra.mxu0 0.0
    %72 = vmatprep.subr.mxu0 0.0
    %73 = vmatpush1.msra.mxu0 0.0
    %74 = vmatprep.subr.mxu0 0.0
    %75 = vmatpush1.msra.mxu0 0.0
    %76 = vmatprep.subr.mxu0 0.0
    %77 = vmatpush1.msra.mxu0 0.0
    %78 = vmatprep.subr.mxu0 0.0
    %79 = vmatpush1.msra.mxu0 0.0
    %80 = vmatprep.subr.mxu0 0.0
    %81 = vmatpush1.msra.mxu0 0.0
    %82 = vmatprep.subr.mxu0 0.0
    %83 = vmatpush1.msra.mxu0 0.0
    %84 = vmatprep.subr.mxu0 0.0
    %85 = vmatpush1.msra.mxu0 0.0
    %86 = vmatprep.subr.mxu0 0.0
    %87 = vmatpush1.msra.mxu0 0.0
    %88 = vmatprep.subr.mxu0 0.0
    %89 = vmatpush1.msra.mxu0 0.0
    %90 = vmatprep.subr.mxu0 0.0
    %91 = vmatpush1.msra.mxu0 0.0
    %92 = vmatprep.subr.mxu0 0.0
    %93 = vmatpush1.msra.mxu0 0.0
    %94 = vmatprep.subr.mxu0 0.0
    %95 = vmatpush1.msra.mxu0 0.0
    %96 = vmatprep.subr.mxu0 0.0
    %97 = vmatpush1.msra.mxu0 0.0
    %98 = vmatprep.subr.mxu0 0.0
    %99 = vmatpush1.msra.mxu0 0.0
    %100 = vmatprep.subr.mxu0 0.0
    %101 = vmatpush1.msra.mxu0 0.0
    %102 = vmatprep.subr.mxu0 0.0
    %103 = vmatpush1.msra.mxu0 0.0
    %104 = vmatprep.subr.mxu0 0.0
    %105 = vmatpush1.msra.mxu0 0.0
    %106 = vmatprep.subr.mxu0 0.0
    %107 = vmatpush1.msra.mxu0 0.0
    %108 = vmatprep.subr.mxu0 0.0
    %109 = vmatpush1.msra.mxu0 0.0
    %110 = vmatprep.subr.mxu0 0.0
    %111 = vmatpush1.msra.mxu0 0.0
    %112 = vmatprep.subr.mxu0 0.0
    %113 = vmatpush1.msra.mxu0 0.0
    %114 = vmatprep.mubr.f32.mxu0 0.0
    %115 = vmatmul.mubr.f32.gmra.mrb[0].mxu0 %v45
    %v116 = vpop.f32.mrb[0].mxu0
    %v117 = vadd.f32 0.0, %v116
    %v118 = vpop.f32.mrb[0].mxu0
    %119 = vmatprep.mubr.f32.mxu0 0.0
    %120 = vmatmul.mubr.f32.gmra.mrb[0].mxu0 %v48
    %v121 = vpop.f32.mrb[0].mxu0
    %v122 = vadd.f32 0.0, %v121
    %v123 = vpop.f32.mrb[0].mxu0
    %124 = vdwg.mxu0
    %v125 = vadd.f32 %v35, %v117
    %v126 = vadd.f32 %v36, %v122
    %127 = vst.msk [vmem:[#allocation2] sm:$0xff] %vm43, %v125
    %128 = vst.msk [vmem:[#allocation2 + $0x8] sm:$0xff] %vm43, %v126
    %v129 = vld [vmem:[%s0] sm:$0xff]
    %v130 = vld [vmem:[%s0 + $0x8] sm:$0xff]
    %v131 = vld [vmem:[#allocation2] sm:$0xff]
    %v132 = vld [vmem:[#allocation2 + $0x8] sm:$0xff]
    %v133 = vadd.f32 %v131, %v129
    %v134 = vadd.f32 %v132, %v130
    %135 = vst.msk [vmem:[#allocation2] sm:$0xff] %vm43, %v133
    %136 = vst.msk [vmem:[#allocation2 + $0x8] sm:$0xff] %vm43, %v134
    // Predicated region
    $region26: #{_addnorm_impl.1} parent=1 // pred_check
      %p137 = pneg %p21
    $region27: #{_addnorm_impl.1} parent=1 // pred_check_branch
      %139 = sbr.rel (%p137) target = $region29
    $region28: #{_addnorm_impl.1} parent=1 // pred_region
      %v140 = vld [vmem:[#allocation2] sm:$0xff]
      %v141 = vld [vmem:[#allocation2 + $0x8] sm:$0xff]
      %v142 = vsel %vm43, %v140, 0.0
      %143 = vadd.xlane.f32.xlu0 %v142
      %v144 = vpop.xlane.xlu0 %143
      %v145 = vsel %vm43, %v141, 0.0
      %146 = vadd.xlane.f32.xlu0 %v145
      %v147 = vpop.xlane.xlu0 %146
      %v148 = vmul.f32 %v144, 0.03125
      %v149 = vmul.f32 %v147, 0.03125
      %v150 = vsub.f32 %v140, %v148
      %v151 = vsub.f32 %v141, %v149
      %152 = vst.msk [vmem:[#allocation2] sm:$0xff] %vm43, %v150
      %153 = vst.msk [vmem:[#allocation2 + $0x8] sm:$0xff] %vm43, %v151
      %v154 = vld [vmem:[#allocation2] sm:$0xff]
      %v155 = vld [vmem:[#allocation2 + $0x8] sm:$0xff]
      %v156 = vmul.f32 %v154, %v154
      %v157 = vmul.f32 %v155, %v155
      %v158 = vsel %vm43, %v156, 0.0
      %159 = vadd.xlane.f32.xlu0 %v158
      %v160 = vpop.xlane.xlu0 %159
      %v161 = vsel %vm43, %v157, 0.0
      %162 = vadd.xlane.f32.xlu0 %v161
      %v163 = vpop.xlane.xlu0 %162
      %v164 = vmul.f32 %v160, 0.03125
      %v165 = vmul.f32 %v163, 0.03125
      %v166 = vadd.f32 %v164, 1e-05
      %v167 = vadd.f32 %v165, 1e-05
      %v168 = vrsqrt.pop %v166
      %v169 = vrsqrt.pop %v167
      %v170 = vmul.f32 %v154, %v168
      %v171 = vmul.f32 %v155, %v169
      %v172 = vld [vmem:[%s3] sm:$0x1]
      %v174 = vlaneseq
      %v175 = vshrl.u32 %v174, 7
      %v176 = vsub.s32 0, %v175
      %v177 = vrot.slane %v172, %v176
      %v179 = vmul.f32 %v170, %v177
      %v180 = vmul.f32 %v171, %v177
      %v181 = vld [vmem:[%s4] sm:$0x1]
      %v183 = vlaneseq
      %v184 = vshrl.u32 %v183, 7
      %v185 = vsub.s32 0, %v184
      %v186 = vrot.slane %v181, %v185
      %v188 = vadd.f32 %v179, %v186
      %v189 = vadd.f32 %v180, %v186
      %190 = vst.msk [vmem:[#allocation3] sm:$0xff] %vm43, %v188
      %191 = vst.msk [vmem:[#allocation3 + $0x8] sm:$0xff] %vm43, %v189
    $region29: #{_addnorm_impl.1} parent=1 // pred_fallthru
      _
    // Predicated region
    $region30: #{_addnorm_impl.1} parent=1 // pred_check
      _
    $region31: #{_addnorm_impl.1} parent=1 // pred_check_branch
      %193 = sbr.rel (0) target = $region33
    $region32: #{_addnorm_impl.1} parent=1 // pred_region
      %s195 = ssub.s32 256, 256
      %196 = vsyncadd [#allocation4], %s195
      %s197 = sshll.u32 [#allocation3], 4
      %s198 = int_to_ptr.vmem [resolvable:$true] %s197
      %203 = dma.vmem_to_hbm [thread:$0]  %s198, 256, %s5, [#allocation4], 128, 128, 8
    $region33: #{_addnorm_impl.1} parent=1 // pred_fallthru
      _
    // Predicated region
    $region34: #{_addnorm_impl.1} parent=1 // pred_check
      _
    $region35: #{_addnorm_impl.1} parent=1 // pred_check_branch
      %205 = sbr.rel (0) target = $region37
    $region36: #{_addnorm_impl.1} parent=1 // pred_region
      %206 = dma.done [#allocation4], 256
    $region37: #{_addnorm_impl.1} parent=1 // pred_fallthru
      _
    %207 = vsyncpa [#allocation4], 1

</llo_original>
